<compile_context>
chip_gen: v5e
topology: v5e:2x2
jax: 0.10.0
libtpu: 0.0.40
codegen_flags: <defaults>
</compile_context>

<pallas_src>
import functools

import jax
import jax.numpy as jnp
from jax.experimental import pallas as pl
from jax.experimental.pallas import tpu as pltpu

LN_EPS = 1e-5  # torch.nn.LayerNorm default


def _round_up(x, m):
    return ((x + m - 1) // m) * m


# ----------------------------------------------------------------------------
# Pallas kernel.  grid = (2 branches, B // TB batch tiles).
# One grid step: node_trans GEMM + top-k message passing + eta mix + masked
# per-graph mean for a whole batch tile of one branch.  On the last batch tile
# of a branch the per-graph head runs once with M = B.
# ----------------------------------------------------------------------------
def _top_gnn_kernel(hidden_ref, adj_ref, wnode_ref, eta_ref,
                    w_trans_ref, b_trans_ref, w_fc_ref, b_fc_ref,
                    gamma_ref, beta_ref, w_br_ref, b_br_ref,
                    out_ref, g_ref, *, predict_dim):
    br = pl.program_id(0)             # 0 = word branch, 1 = semantic branch
    t = pl.program_id(1)              # batch-tile index
    num_tiles = pl.num_programs(1)

    tb = hidden_ref.shape[1]
    s = hidden_ref.shape[2]
    d = hidden_ref.shape[3]
    pp = w_trans_ref.shape[2]

    # node_trans: Linear(D -> P) as one (TB*S, D) x (D, Pp) GEMM (big M).
    h2d = hidden_ref[0].reshape(tb * s, d)
    h0 = jnp.dot(h2d, w_trans_ref[br], preferred_element_type=jnp.float32)
    h0 = (h0 + b_trans_ref[br]).reshape(tb, s, pp)

    # message passing: after[i] = mean over kept top-k neighbours of h0[src].
    # Adjacency is streamed from HBM as bf16; accumulate in f32.
    adj = adj_ref[0].astype(jnp.float32)
    after = jnp.einsum("bst,btp->bsp", adj, h0,
                       preferred_element_type=jnp.float32)

    eta = eta_ref[br]                          # SMEM scalar
    new_h = eta * h0 + (1.0 - eta) * after     # (TB, S, Pp)

    # dgl.mean_nodes: wnode already folds the validity mask and 1/length.
    g_ref[t] = jnp.sum(new_h * wnode_ref[...], axis=1)    # (TB, Pp)

    # Head hoisted out of the per-graph loop: one M = B pass per branch.
    @pl.when(t == num_tiles - 1)
    def _head():
        g = g_ref[...].reshape(g_ref.shape[0] * g_ref.shape[1], pp)   # (B, Pp)
        act = jnp.tanh(g)                      # dropout == identity at inference
        f = jnp.dot(act, w_fc_ref[br],
                    preferred_element_type=jnp.float32) + b_fc_ref[br]

        # LayerNorm over the true predict_dim lanes (padded lanes are exact 0).
        lane = jax.lax.broadcasted_iota(jnp.int32, f.shape, 1)
        fmask = (lane < predict_dim).astype(jnp.float32)
        inv_p = 1.0 / float(predict_dim)
        mu = jnp.sum(f * fmask, axis=-1, keepdims=True) * inv_p
        diff = (f - mu) * fmask
        var = jnp.sum(diff * diff, axis=-1, keepdims=True) * inv_p
        ln = diff * jax.lax.rsqrt(var + LN_EPS) * gamma_ref[br] + beta_ref[br]

        # branch head (word_fc / semantic_fc) + tanh
        o = jnp.dot(ln, w_br_ref[br],
                    preferred_element_type=jnp.float32) + b_br_ref[br]
        out_ref[0] = jnp.tanh(o).astype(out_ref.dtype)


# ----------------------------------------------------------------------------
# Glue (plain JAX / XLA): top-k edge selection -> dense row-normalized
# adjacency via scatter-add (no (B,S,K,S) one-hot), stored as bf16.
# TODO(synk): dgl's dynamic nonzero() edge-list construction is expressed as a
# dense masked adjacency; attention.mean(heads) + top_k stay in XLA (no
# efficient in-kernel top-k on TPU).
# ----------------------------------------------------------------------------
def _build_adjacency(attention, lengths, top_rate):
    B, H, S, _ = attention.shape
    K = max(int(round(top_rate * S)), 1)
    avg_atten = attention.mean(axis=1)                         # (B, S, S)
    vals, idx = jax.lax.top_k(avg_atten, K)                    # (B, S, K)
    any_pos = jnp.any(vals > 0.0, axis=-1, keepdims=True)
    # softmax(where(v>0, v, -1e9)) is nonzero iff v>0, unless the whole row is
    # non-positive, in which case every edge survives with weight 1 ('mean').
    keep = jnp.where(any_pos, vals > 0.0, True)
    cnt = jnp.maximum(jnp.sum(keep, axis=-1, keepdims=True), 1).astype(jnp.float32)
    w = keep.astype(jnp.float32) / cnt
    row_valid = jnp.arange(S)[None, :, None] < lengths[:, None, None]
    w = jnp.where(row_valid, w, 0.0)
    b_idx = jnp.arange(B)[:, None, None]
    r_idx = jnp.arange(S)[None, :, None]
    adj = jnp.zeros((B, S, S), jnp.float32).at[b_idx, r_idx, idx].add(w)
    return adj.astype(jnp.bfloat16)


def _node_weights(lengths, S):
    """(B, S, 1): 1/len for the first `len` nodes of each graph, 0 elsewhere."""
    len_c = jnp.maximum(lengths, 1).astype(jnp.float32)        # guard length == 0
    valid = (jnp.arange(S)[None, :] < lengths[:, None]).astype(jnp.float32)
    return (valid / len_c[:, None])[:, :, None]


def _stack_and_pad_params(pw, ps, D, Pp):
    """Stack word/semantic params on a leading branch axis, zero-padded so the
    output-feature dims are lane-dense multiples of 128 (input dim D stays)."""
    def pad_to(x, rows, cols):
        return jnp.pad(x, ((0, rows - x.shape[0]), (0, cols - x.shape[1])))

    def stack(key, rows, cols):
        return jnp.stack([pad_to(pw[key], rows, cols),
                          pad_to(ps[key], rows, cols)], axis=0)

    return {
        "w_trans": stack("w_trans", D, Pp),
        "b_trans": stack("b_trans", 1, Pp),
        "eta": jnp.concatenate([pw["eta"].reshape(1), ps["eta"].reshape(1)]),
        "w_fc": stack("w_fc", Pp, Pp),
        "b_fc": stack("b_fc", 1, Pp),
        "gamma": stack("gamma", 1, Pp),      # padded with 0: masked LN handles it
        "beta": stack("beta", 1, Pp),
        "w_branch": stack("w_branch", Pp, Pp),
        "b_branch": stack("b_branch", 1, Pp),
    }


def top_gnn_forward(output, lengths, params, top_rate=0.1, batch_tile=None):
    """TopGNN.forward: word branch uses hidden_states[0]/attentions[0], semantic
    branch uses hidden_states[-2]/attentions[-1]. Both branches run inside one
    pallas_call; the branch axis is marked "parallel" (2 TensorCores on v7x)."""
    word_attention = output["attentions"][0]
    word_embed = output["hidden_states"][0]
    semantic_attention = output["attentions"][-1]
    semantic_embed = output["hidden_states"][-2]

    B, S, D = word_embed.shape
    P = params["word"]["w_trans"].shape[1]
    Pp = _round_up(P, 128)

    adj_all = jnp.stack(
        [_build_adjacency(word_attention, lengths, top_rate),
         _build_adjacency(semantic_attention, lengths, top_rate)], axis=0)  # bf16
    hidden_all = jnp.stack([word_embed, semantic_embed], axis=0).astype(jnp.float32)
    w_node = _node_weights(lengths, S)                                       # (B,S,1)
    p = _stack_and_pad_params(params["word"], params["semantic"], D, Pp)

    # Batch tile: largest divisor of B whose streamed tiles + f32 intermediates
    # stay well inside scoped VMEM on every chip generation.
    if batch_tile is None:
        vmem_budget = 8 * 1024 * 1024
        def tile_bytes(tb):
            streamed = tb * S * D * 4 + tb * S * S * 2 + tb * S * 4
            interms = 3 * tb * S * Pp * 4          # h0, after, new_h (f32)
            return 2 * streamed + interms          # double-buffered inputs
        batch_tile = B
        while batch_tile > 1 and (B % batch_tile or tile_bytes(batch_tile) > vmem_budget):
            batch_tile -= 1
    assert B % batch_tile == 0, "batch_tile must divide the batch size"
    tb = batch_tile
    num_tiles = B // tb

    def vmem_param():
        # Branch-stacked constant weights: a single VMEM-resident copy for the
        # whole call (no per-grid-step double-buffering of constants).
        return pl.BlockSpec(memory_space=pltpu.MemorySpace.VMEM)

    kernel = functools.partial(_top_gnn_kernel, predict_dim=P)

    out = pl.pallas_call(
        kernel,
        out_shape=jax.ShapeDtypeStruct((2, B, Pp), jnp.float32),
        grid=(2, num_tiles),
        in_specs=[
            pl.BlockSpec((1, tb, S, D), lambda br, t: (br, t, 0, 0)),   # hidden
            pl.BlockSpec((1, tb, S, S), lambda br, t: (br, t, 0, 0)),   # adjacency
            pl.BlockSpec((tb, S, 1), lambda br, t: (t, 0, 0)),          # node weights
            pl.BlockSpec(memory_space=pltpu.MemorySpace.SMEM),          # eta (2,)
            vmem_param(),  # w_trans (2, D, Pp)
            vmem_param(),  # b_trans (2, 1, Pp)
            vmem_param(),  # w_fc    (2, Pp, Pp)
            vmem_param(),  # b_fc    (2, 1, Pp)
            vmem_param(),  # gamma   (2, 1, Pp)
            vmem_param(),  # beta    (2, 1, Pp)
            vmem_param(),  # w_branch(2, Pp, Pp)
            vmem_param(),  # b_branch(2, 1, Pp)
        ],
        out_specs=pl.BlockSpec((1, B, Pp), lambda br, t: (br, 0, 0)),
        scratch_shapes=[pltpu.VMEM((num_tiles, tb, Pp), jnp.float32)],
        compiler_params=pltpu.CompilerParams(
            dimension_semantics=("parallel", "arbitrary"),
            vmem_limit_bytes=64 * 1024 * 1024,
        ),
    )(
        hidden_all, adj_all, w_node, p["eta"],
        p["w_trans"], p["b_trans"], p["w_fc"], p["b_fc"],
        p["gamma"], p["beta"], p["w_branch"], p["b_branch"],
    )
    return out[0, :, :P], out[1, :, :P]


# ----------------------------------------------------------------------------
# Pure-JAX reference (shares the same bf16 adjacency, so precision is apples
# to apples with the Pallas path).
# ----------------------------------------------------------------------------
def _reference_branch(hidden, adj_bf16, lengths, params):
    adj = adj_bf16.astype(jnp.float32)
    h0 = jnp.einsum("bsd,dp->bsp", hidden, params["w_trans"]) + params["b_trans"]
    after = jnp.einsum("bst,btp->bsp", adj, h0)
    eta = params["eta"][0, 0]
    new_h = eta * h0 + (1.0 - eta) * after
    S = hidden.shape[1]
    valid = (jnp.arange(S)[None, :, None] < lengths[:, None, None]).astype(jnp.float32)
    denom = jnp.maximum(lengths, 1).astype(jnp.float32)[:, None]
    g = jnp.sum(new_h * valid, axis=1) / denom
    f = jnp.tanh(g) @ params["w_fc"] + params["b_fc"]
    mu = jnp.mean(f, axis=-1, keepdims=True)
    var = jnp.mean((f - mu) ** 2, axis=-1, keepdims=True)
    ln = (f - mu) / jnp.sqrt(var + LN_EPS) * params["gamma"] + params["beta"]
    return jnp.tanh(ln @ params["w_branch"] + params["b_branch"])


# ----------------------------------------------------------------------------
# Deterministic parameter init (synthetic weights, no checkpoint loading).
# ----------------------------------------------------------------------------
def _init_branch_params(key, dim_model, output_dim):
    ks = jax.random.split(key, 6)
    P = output_dim
    return {
        "w_trans": 0.1 * jax.random.normal(ks[0], (dim_model, P), jnp.float32),
        "b_trans": 0.1 * jax.random.normal(ks[1], (1, P), jnp.float32),
        "eta": jnp.zeros((1, 1), jnp.float32),   # node_eta.data.fill_(0)
        "w_fc": 0.1 * jax.random.normal(ks[2], (P, P), jnp.float32),
        "b_fc": 0.1 * jax.random.normal(ks[3], (1, P), jnp.float32),
        "gamma": jnp.ones((1, P), jnp.float32),
        "beta": jnp.zeros((1, P), jnp.float32),
        "w_branch": 0.1 * jax.random.normal(ks[4], (P, P), jnp.float32),
        "b_branch": 0.1 * jax.random.normal(ks[5], (1, P), jnp.float32),
    }


if __name__ == "__main__":
    B, H, S, D, P = 2, 4, 16, 32, 16   # batch, heads, seq, dim_model, output_dim
    top_rate = 0.1

    key = jax.random.PRNGKey(0)
    k_h0, k_h1, k_h2, k_a0, k_a1, k_pw, k_ps = jax.random.split(key, 7)

    lengths = jnp.array([16, 12], dtype=jnp.int32)

    def make_attention(k):
        logits = jax.random.normal(k, (B, H, S, S), jnp.float32)
        col_ok = jnp.arange(S)[None, None, None, :] < lengths[:, None, None, None]
        logits = jnp.where(col_ok, logits, -1e9)
        return jax.nn.softmax(logits, axis=-1)

    hidden_states = [
        jax.random.normal(k_h0, (B, S, D), jnp.float32),
        jax.random.normal(k_h1, (B, S, D), jnp.float32),
        jax.random.normal(k_h2, (B, S, D), jnp.float32),
    ]
    attentions = [make_attention(k_a0), make_attention(k_a1)]
    output = {"hidden_states": hidden_states, "attentions": attentions}

    params = {
        "word": _init_branch_params(k_pw, D, P),
        "semantic": _init_branch_params(k_ps, D, P),
    }

    word_out, sem_out = top_gnn_forward(output, lengths, params, top_rate)
    jax.block_until_ready((word_out, sem_out))

    # correctness check against a pure-JAX reference (same bf16 adjacency)
    adj_word = _build_adjacency(output["attentions"][0], lengths, top_rate)
    adj_sem = _build_adjacency(output["attentions"][-1], lengths, top_rate)
    ref_word = _reference_branch(output["hidden_states"][0], adj_word,
                                 lengths, params["word"])
    ref_sem = _reference_branch(output["hidden_states"][-2], adj_sem,
                                lengths, params["semantic"])

    assert word_out.shape == (B, P) and sem_out.shape == (B, P)
    err_w = float(jnp.max(jnp.abs(word_out - ref_word)))
    err_s = float(jnp.max(jnp.abs(sem_out - ref_sem)))
    assert jnp.allclose(word_out, ref_word, atol=2e-3, rtol=2e-3), err_w
    assert jnp.allclose(sem_out, ref_sem, atol=2e-3, rtol=2e-3), err_s

    print("KERNEL_OK")
</pallas_src>

<mosaic_0001>
module attributes {stable_mosaic.version = 11 : i64} {
  func.func @_top_gnn_kernel(%arg0: i32, %arg1: i32, %arg2: memref<1x2x16x32xf32, #tpu.memory_space<vmem>>, %arg3: memref<1x2x16x16xbf16, #tpu.memory_space<vmem>>, %arg4: memref<2x16x1xf32, #tpu.memory_space<vmem>>, %arg5: memref<2xf32, #tpu.memory_space<smem>>, %arg6: memref<2x32x128xf32, #tpu.memory_space<vmem>>, %arg7: memref<2x1x128xf32, #tpu.memory_space<vmem>>, %arg8: memref<2x128x128xf32, #tpu.memory_space<vmem>>, %arg9: memref<2x1x128xf32, #tpu.memory_space<vmem>>, %arg10: memref<2x1x128xf32, #tpu.memory_space<vmem>>, %arg11: memref<2x1x128xf32, #tpu.memory_space<vmem>>, %arg12: memref<2x128x128xf32, #tpu.memory_space<vmem>>, %arg13: memref<2x1x128xf32, #tpu.memory_space<vmem>>, %arg14: memref<1x2x128xf32, #tpu.memory_space<vmem>>, %arg15: memref<1x2x128xf32, #tpu.memory_space<vmem>>) attributes {dimension_semantics = [#tpu.dimension_semantics<parallel>, #tpu.dimension_semantics<arbitrary>], iteration_bounds = array<i64: 2, 1>, scalar_prefetch = 0 : i64, scratch_operands = 1 : i64, tpu.core_type = #tpu.core_type<tc>, window_params = [{transform_indices = @transform_0, window_bounds = array<i64: 1, 2, 16, 32>}, {transform_indices = @transform_1, window_bounds = array<i64: 1, 2, 16, 16>}, {transform_indices = @transform_2, window_bounds = array<i64: 2, 16, 1>}, {transform_indices = @transform_3, window_bounds = array<i64: 2>}, {pipeline_mode = #tpu.pipeline_mode<synchronous>, transform_indices = @transform_4, window_bounds = array<i64: 2, 32, 128>}, {pipeline_mode = #tpu.pipeline_mode<synchronous>, transform_indices = @transform_5, window_bounds = array<i64: 2, 1, 128>}, {pipeline_mode = #tpu.pipeline_mode<synchronous>, transform_indices = @transform_6, window_bounds = array<i64: 2, 128, 128>}, {pipeline_mode = #tpu.pipeline_mode<synchronous>, transform_indices = @transform_7, window_bounds = array<i64: 2, 1, 128>}, {pipeline_mode = #tpu.pipeline_mode<synchronous>, transform_indices = @transform_8, window_bounds = array<i64: 2, 1, 128>}, {pipeline_mode = #tpu.pipeline_mode<synchronous>, transform_indices = @transform_9, window_bounds = array<i64: 2, 1, 128>}, {pipeline_mode = #tpu.pipeline_mode<synchronous>, transform_indices = @transform_10, window_bounds = array<i64: 2, 128, 128>}, {pipeline_mode = #tpu.pipeline_mode<synchronous>, transform_indices = @transform_11, window_bounds = array<i64: 2, 1, 128>}, {transform_indices = @transform_12, window_bounds = array<i64: 1, 2, 128>}]} {
    %c0 = arith.constant 0 : index
    %c0_0 = arith.constant 0 : index
    %c0_1 = arith.constant 0 : index
    %c0_2 = arith.constant 0 : index
    %0 = vector.load %arg2[%c0, %c0_0, %c0_1, %c0_2] : memref<1x2x16x32xf32, #tpu.memory_space<vmem>>, vector<1x2x16x32xf32>
    %1 = vector.shape_cast %0 : vector<1x2x16x32xf32> to vector<2x16x32xf32>
    %2 = vector.shape_cast %1 : vector<2x16x32xf32> to vector<32x32xf32>
    %3 = arith.index_cast %arg0 : i32 to index
    %c0_3 = arith.constant 0 : index
    %c0_4 = arith.constant 0 : index
    %4 = vector.load %arg6[%3, %c0_3, %c0_4] : memref<2x32x128xf32, #tpu.memory_space<vmem>>, vector<1x32x128xf32>
    %5 = vector.shape_cast %4 : vector<1x32x128xf32> to vector<32x128xf32>
    %cst = arith.constant dense<0.000000e+00> : vector<32x128xf32>
    %6 = tpu.matmul %2, %5, %cst {dimension_numbers = #tpu.dot_dimension_numbers<[1], [0], [0], [1], [0, 0, 1, 1], [], []>} : vector<32x32xf32>, vector<32x128xf32>, vector<32x128xf32> -> vector<32x128xf32>
    %7 = arith.index_cast %arg0 : i32 to index
    %c0_5 = arith.constant 0 : index
    %c0_6 = arith.constant 0 : index
    %8 = vector.load %arg7[%7, %c0_5, %c0_6] : memref<2x1x128xf32, #tpu.memory_space<vmem>>, vector<1x1x128xf32>
    %9 = vector.shape_cast %8 : vector<1x1x128xf32> to vector<1x128xf32>
    %10 = vector.broadcast %9 : vector<1x128xf32> to vector<32x128xf32>
    %11 = arith.addf %6, %10 : vector<32x128xf32>
    %12 = vector.shape_cast %11 : vector<32x128xf32> to vector<2x16x128xf32>
    %c0_7 = arith.constant 0 : index
    %c0_8 = arith.constant 0 : index
    %c0_9 = arith.constant 0 : index
    %c0_10 = arith.constant 0 : index
    %13 = vector.load %arg3[%c0_7, %c0_8, %c0_9, %c0_10] : memref<1x2x16x16xbf16, #tpu.memory_space<vmem>>, vector<1x2x16x16xbf16>
    %14 = vector.shape_cast %13 : vector<1x2x16x16xbf16> to vector<2x16x16xbf16>
    %15 = arith.extf %14 : vector<2x16x16xbf16> to vector<2x16x16xf32>
    "tpu.trace_start"() <{level = 10 : i32, message = "bst,btp->bsp"}> : () -> ()
    %cst_11 = arith.constant dense<0.000000e+00> : vector<2x16x128xf32>
    %16 = tpu.matmul %15, %12, %cst_11 {dimension_numbers = #tpu.dot_dimension_numbers<[2], [1], [1], [2], [0, 0, 0, 1, 1, 2], [0], [0]>} : vector<2x16x16xf32>, vector<2x16x128xf32>, vector<2x16x128xf32> -> vector<2x16x128xf32>
    "tpu.trace_stop"() : () -> ()
    %17 = arith.index_cast %arg0 : i32 to index
    %18 = memref.load %arg5[%17] : memref<2xf32, #tpu.memory_space<smem>>
    %19 = vector.broadcast %18 : f32 to vector<2x16x128xf32>
    %20 = arith.mulf %19, %12 : vector<2x16x128xf32>
    %cst_12 = arith.constant 1.000000e+00 : f32
    %21 = arith.subf %cst_12, %18 : f32
    %22 = vector.broadcast %21 : f32 to vector<2x16x128xf32>
    %23 = arith.mulf %22, %16 : vector<2x16x128xf32>
    %24 = arith.addf %20, %23 : vector<2x16x128xf32>
    %c0_13 = arith.constant 0 : index
    %c0_14 = arith.constant 0 : index
    %c0_15 = arith.constant 0 : index
    %25 = vector.load %arg4[%c0_13, %c0_14, %c0_15] : memref<2x16x1xf32, #tpu.memory_space<vmem>>, vector<2x16x1xf32>
    %26 = vector.broadcast %25 : vector<2x16x1xf32> to vector<2x16x128xf32>
    %27 = arith.mulf %24, %26 : vector<2x16x128xf32>
    %cst_16 = arith.constant dense<0.000000e+00> : vector<2x128xf32>
    %28 = vector.multi_reduction <add>, %27, %cst_16 [1] : vector<2x16x128xf32> to vector<2x128xf32>
    %29 = arith.index_cast %arg1 : i32 to index
    %c0_17 = arith.constant 0 : index
    %c0_18 = arith.constant 0 : index
    %30 = vector.load %arg15[%29, %c0_17, %c0_18] : memref<1x2x128xf32, #tpu.memory_space<vmem>>, vector<1x2x128xf32>
    %31 = vector.shape_cast %30 : vector<1x2x128xf32> to vector<2x128xf32>
    %32 = vector.shape_cast %28 : vector<2x128xf32> to vector<1x2x128xf32>
    tpu.vector_store %arg15[%29, %c0_17, %c0_18], %32 {strides = array<i32>} : memref<1x2x128xf32, #tpu.memory_space<vmem>>, vector<1x2x128xf32>,
    %c0_i32 = arith.constant 0 : i32
    %33 = arith.cmpi eq, %arg1, %c0_i32 : i32
    %34 = arith.extui %33 : i1 to i32
    %c0_i32_19 = arith.constant 0 : i32
    %35 = arith.cmpi ne, %34, %c0_i32_19 : i32
    scf.if %35 {
      %c0_20 = arith.constant 0 : index
      %c0_21 = arith.constant 0 : index
      %c0_22 = arith.constant 0 : index
      %36 = vector.load %arg15[%c0_20, %c0_21, %c0_22] : memref<1x2x128xf32, #tpu.memory_space<vmem>>, vector<1x2x128xf32>
      %37 = vector.shape_cast %36 : vector<1x2x128xf32> to vector<2x128xf32>
      %38 = math.tanh %37 : vector<2x128xf32>
      %39 = arith.index_cast %arg0 : i32 to index
      %c0_23 = arith.constant 0 : index
      %c0_24 = arith.constant 0 : index
      %40 = vector.load %arg8[%39, %c0_23, %c0_24] : memref<2x128x128xf32, #tpu.memory_space<vmem>>, vector<1x128x128xf32>
      %41 = vector.shape_cast %40 : vector<1x128x128xf32> to vector<128x128xf32>
      %cst_25 = arith.constant dense<0.000000e+00> : vector<2x128xf32>
      %42 = tpu.matmul %38, %41, %cst_25 {dimension_numbers = #tpu.dot_dimension_numbers<[1], [0], [0], [1], [0, 0, 1, 1], [], []>} : vector<2x128xf32>, vector<128x128xf32>, vector<2x128xf32> -> vector<2x128xf32>
      %43 = arith.index_cast %arg0 : i32 to index
      %c0_26 = arith.constant 0 : index
      %c0_27 = arith.constant 0 : index
      %44 = vector.load %arg9[%43, %c0_26, %c0_27] : memref<2x1x128xf32, #tpu.memory_space<vmem>>, vector<1x1x128xf32>
      %45 = vector.shape_cast %44 : vector<1x1x128xf32> to vector<1x128xf32>
      %46 = vector.broadcast %45 : vector<1x128xf32> to vector<2x128xf32>
      %47 = arith.addf %42, %46 : vector<2x128xf32>
      %48 = tpu.iota {dimensions = array<i32: 1>} : vector<2x128xi32>
      %c16_i32 = arith.constant 16 : i32
      %49 = vector.broadcast %c16_i32 : i32 to vector<2x128xi32>
      %50 = arith.cmpi slt, %48, %49 : vector<2x128xi32>
      %51 = arith.extui %50 : vector<2x128xi1> to vector<2x128xi32>
      %52 = arith.sitofp %51 : vector<2x128xi32> to vector<2x128xf32>
      %53 = arith.mulf %47, %52 : vector<2x128xf32>
      %cst_28 = arith.constant dense<0.000000e+00> : vector<2xf32>
      %54 = vector.multi_reduction <add>, %53, %cst_28 [1] : vector<2x128xf32> to vector<2xf32>
      %55 = vector.shape_cast %54 : vector<2xf32> to vector<2x1xf32>
      %cst_29 = arith.constant 6.250000e-02 : f32
      %56 = vector.broadcast %cst_29 : f32 to vector<2x1xf32>
      %57 = arith.mulf %55, %56 : vector<2x1xf32>
      %58 = vector.broadcast %57 : vector<2x1xf32> to vector<2x128xf32>
      %59 = arith.subf %47, %58 : vector<2x128xf32>
      %60 = arith.mulf %59, %52 : vector<2x128xf32>
      %61 = arith.mulf %60, %60 : vector<2x128xf32>
      %cst_30 = arith.constant dense<0.000000e+00> : vector<2xf32>
      %62 = vector.multi_reduction <add>, %61, %cst_30 [1] : vector<2x128xf32> to vector<2xf32>
      %63 = vector.shape_cast %62 : vector<2xf32> to vector<2x1xf32>
      %cst_31 = arith.constant 6.250000e-02 : f32
      %64 = vector.broadcast %cst_31 : f32 to vector<2x1xf32>
      %65 = arith.mulf %63, %64 : vector<2x1xf32>
      %cst_32 = arith.constant 9.99999974E-6 : f32
      %66 = vector.broadcast %cst_32 : f32 to vector<2x1xf32>
      %67 = arith.addf %65, %66 : vector<2x1xf32>
      %68 = math.rsqrt %67 : vector<2x1xf32>
      %69 = vector.broadcast %68 : vector<2x1xf32> to vector<2x128xf32>
      %70 = arith.mulf %60, %69 : vector<2x128xf32>
      %71 = arith.index_cast %arg0 : i32 to index
      %c0_33 = arith.constant 0 : index
      %c0_34 = arith.constant 0 : index
      %72 = vector.load %arg10[%71, %c0_33, %c0_34] : memref<2x1x128xf32, #tpu.memory_space<vmem>>, vector<1x1x128xf32>
      %73 = vector.shape_cast %72 : vector<1x1x128xf32> to vector<1x128xf32>
      %74 = vector.broadcast %73 : vector<1x128xf32> to vector<2x128xf32>
      %75 = arith.mulf %70, %74 : vector<2x128xf32>
      %76 = arith.index_cast %arg0 : i32 to index
      %c0_35 = arith.constant 0 : index
      %c0_36 = arith.constant 0 : index
      %77 = vector.load %arg11[%76, %c0_35, %c0_36] : memref<2x1x128xf32, #tpu.memory_space<vmem>>, vector<1x1x128xf32>
      %78 = vector.shape_cast %77 : vector<1x1x128xf32> to vector<1x128xf32>
      %79 = vector.broadcast %78 : vector<1x128xf32> to vector<2x128xf32>
      %80 = arith.addf %75, %79 : vector<2x128xf32>
      %81 = arith.index_cast %arg0 : i32 to index
      %c0_37 = arith.constant 0 : index
      %c0_38 = arith.constant 0 : index
      %82 = vector.load %arg12[%81, %c0_37, %c0_38] : memref<2x128x128xf32, #tpu.memory_space<vmem>>, vector<1x128x128xf32>
      %83 = vector.shape_cast %82 : vector<1x128x128xf32> to vector<128x128xf32>
      %cst_39 = arith.constant dense<0.000000e+00> : vector<2x128xf32>
      %84 = tpu.matmul %80, %83, %cst_39 {dimension_numbers = #tpu.dot_dimension_numbers<[1], [0], [0], [1], [0, 0, 1, 1], [], []>} : vector<2x128xf32>, vector<128x128xf32>, vector<2x128xf32> -> vector<2x128xf32>
      %85 = arith.index_cast %arg0 : i32 to index
      %c0_40 = arith.constant 0 : index
      %c0_41 = arith.constant 0 : index
      %86 = vector.load %arg13[%85, %c0_40, %c0_41] : memref<2x1x128xf32, #tpu.memory_space<vmem>>, vector<1x1x128xf32>
      %87 = vector.shape_cast %86 : vector<1x1x128xf32> to vector<1x128xf32>
      %88 = vector.broadcast %87 : vector<1x128xf32> to vector<2x128xf32>
      %89 = arith.addf %84, %88 : vector<2x128xf32>
      %90 = math.tanh %89 : vector<2x128xf32>
      %c0_42 = arith.constant 0 : index
      %c0_43 = arith.constant 0 : index
      %c0_44 = arith.constant 0 : index
      %91 = vector.load %arg14[%c0_42, %c0_43, %c0_44] : memref<1x2x128xf32, #tpu.memory_space<vmem>>, vector<1x2x128xf32>
      %92 = vector.shape_cast %91 : vector<1x2x128xf32> to vector<2x128xf32>
      %93 = vector.shape_cast %90 : vector<2x128xf32> to vector<1x2x128xf32>
      tpu.vector_store %arg14[%c0_42, %c0_43, %c0_44], %93 {strides = array<i32>} : memref<1x2x128xf32, #tpu.memory_space<vmem>>, vector<1x2x128xf32>,
    } else {
    }
    return
  }
  func.func @transform_0(%arg0: i32, %arg1: i32) -> (i32, i32, i32, i32) {
    %c0_i32 = arith.constant 0 : i32
    %c0_i32_0 = arith.constant 0 : i32
    %c0_i32_1 = arith.constant 0 : i32
    return %arg0, %arg1, %c0_i32, %c0_i32_0 : i32, i32, i32, i32
  }
  func.func @transform_1(%arg0: i32, %arg1: i32) -> (i32, i32, i32, i32) {
    %c0_i32 = arith.constant 0 : i32
    %c0_i32_0 = arith.constant 0 : i32
    %c0_i32_1 = arith.constant 0 : i32
    return %arg0, %arg1, %c0_i32, %c0_i32_0 : i32, i32, i32, i32
  }
  func.func @transform_2(%arg0: i32, %arg1: i32) -> (i32, i32, i32) {
    %c0_i32 = arith.constant 0 : i32
    %c0_i32_0 = arith.constant 0 : i32
    %c0_i32_1 = arith.constant 0 : i32
    return %arg1, %c0_i32, %c0_i32_0 : i32, i32, i32
  }
  func.func @transform_3(%arg0: i32, %arg1: i32) -> i32 {
    %c0_i32 = arith.constant 0 : i32
    %c0_i32_0 = arith.constant 0 : i32
    return %c0_i32 : i32
  }
  func.func @transform_4(%arg0: i32, %arg1: i32) -> (i32, i32, i32) {
    %c0_i32 = arith.constant 0 : i32
    %c0_i32_0 = arith.constant 0 : i32
    %c0_i32_1 = arith.constant 0 : i32
    %c0_i32_2 = arith.constant 0 : i32
    return %c0_i32, %c0_i32_0, %c0_i32_1 : i32, i32, i32
  }
  func.func @transform_5(%arg0: i32, %arg1: i32) -> (i32, i32, i32) {
    %c0_i32 = arith.constant 0 : i32
    %c0_i32_0 = arith.constant 0 : i32
    %c0_i32_1 = arith.constant 0 : i32
    %c0_i32_2 = arith.constant 0 : i32
    return %c0_i32, %c0_i32_0, %c0_i32_1 : i32, i32, i32
  }
  func.func @transform_6(%arg0: i32, %arg1: i32) -> (i32, i32, i32) {
    %c0_i32 = arith.constant 0 : i32
    %c0_i32_0 = arith.constant 0 : i32
    %c0_i32_1 = arith.constant 0 : i32
    %c0_i32_2 = arith.constant 0 : i32
    return %c0_i32, %c0_i32_0, %c0_i32_1 : i32, i32, i32
  }
  func.func @transform_7(%arg0: i32, %arg1: i32) -> (i32, i32, i32) {
    %c0_i32 = arith.constant 0 : i32
    %c0_i32_0 = arith.constant 0 : i32
    %c0_i32_1 = arith.constant 0 : i32
    %c0_i32_2 = arith.constant 0 : i32
    return %c0_i32, %c0_i32_0, %c0_i32_1 : i32, i32, i32
  }
  func.func @transform_8(%arg0: i32, %arg1: i32) -> (i32, i32, i32) {
    %c0_i32 = arith.constant 0 : i32
    %c0_i32_0 = arith.constant 0 : i32
    %c0_i32_1 = arith.constant 0 : i32
    %c0_i32_2 = arith.constant 0 : i32
    return %c0_i32, %c0_i32_0, %c0_i32_1 : i32, i32, i32
  }
  func.func @transform_9(%arg0: i32, %arg1: i32) -> (i32, i32, i32) {
    %c0_i32 = arith.constant 0 : i32
    %c0_i32_0 = arith.constant 0 : i32
    %c0_i32_1 = arith.constant 0 : i32
    %c0_i32_2 = arith.constant 0 : i32
    return %c0_i32, %c0_i32_0, %c0_i32_1 : i32, i32, i32
  }
  func.func @transform_10(%arg0: i32, %arg1: i32) -> (i32, i32, i32) {
    %c0_i32 = arith.constant 0 : i32
    %c0_i32_0 = arith.constant 0 : i32
    %c0_i32_1 = arith.constant 0 : i32
    %c0_i32_2 = arith.constant 0 : i32
    return %c0_i32, %c0_i32_0, %c0_i32_1 : i32, i32, i32
  }
  func.func @transform_11(%arg0: i32, %arg1: i32) -> (i32, i32, i32) {
    %c0_i32 = arith.constant 0 : i32
    %c0_i32_0 = arith.constant 0 : i32
    %c0_i32_1 = arith.constant 0 : i32
    %c0_i32_2 = arith.constant 0 : i32
    return %c0_i32, %c0_i32_0, %c0_i32_1 : i32, i32, i32
  }
  func.func @transform_12(%arg0: i32, %arg1: i32) -> (i32, i32, i32) {
    %c0_i32 = arith.constant 0 : i32
    %c0_i32_0 = arith.constant 0 : i32
    %c0_i32_1 = arith.constant 0 : i32
    return %arg0, %c0_i32, %c0_i32_0 : i32, i32, i32
  }
}

</mosaic_0001>

<llo_original>
// kernel: tpu_custom_call.1
$region0: #{tpu_custom_call.1}
  #allocation0 [shape = 'u32[]', space=smem, size = 0x4, offset = 0x4, fixed_abs, tag = 'smem constant byte address 0x4 - core index']
  #allocation1 [shape = 'u32[72,128]{1,0:T(1,128)}', space=vmem, size = 0x9000, scoped, tag = 'internal scratch']
  #allocation2 [shape = 'f32[1,2,128]{2,1,0:T(2,128)}', space=vmem, size = 0x400, scoped, tag = 'scratch operand']
  %s0 = inlined_call_operand.hbm [shape: f32[2,2,16,32], index: 0, kind: input, shape index: {}]
  %s1 = inlined_call_operand.vmem [shape: bf16[2,2,16,16], index: 1, kind: input, shape index: {}]
  %s2 = inlined_call_operand.vmem [shape: f32[2,16,1], index: 2, kind: input, shape index: {}]
  %s3 = inlined_call_operand.hbm [shape: f32[2], index: 3, kind: input, shape index: {}]
  %s4 = inlined_call_operand.hbm [shape: f32[2,32,128], index: 4, kind: input, shape index: {}]
  %s5 = inlined_call_operand.vmem [shape: f32[2,1,128], index: 5, kind: input, shape index: {}]
  %s6 = inlined_call_operand.hbm [shape: f32[2,128,128], index: 6, kind: input, shape index: {}]
  %s7 = inlined_call_operand.vmem [shape: f32[2,1,128], index: 7, kind: input, shape index: {}]
  %s8 = inlined_call_operand.vmem [shape: f32[2,1,128], index: 8, kind: input, shape index: {}]
  %s9 = inlined_call_operand.vmem [shape: f32[2,1,128], index: 9, kind: input, shape index: {}]
  %s10 = inlined_call_operand.hbm [shape: f32[2,128,128], index: 10, kind: input, shape index: {}]
  %s11 = inlined_call_operand.vmem [shape: f32[2,1,128], index: 11, kind: input, shape index: {}]
  %s12 = inlined_call_operand.hbm [shape: f32[2,2,128], index: 12, kind: output, shape index: {}]
  %s13 = sld [smem:[#allocation0]]
  $region105: #{tpu_custom_call.1} parent=0
    _
  %s15 = ssub.s32 1, %s13
  %s16 = scalar_select 0, %s15, %s13
  $region1: #{tpu_custom_call.1} parent=0
    #allocation3 [shape = 'u8[32768]{0}', space=vmem, size = 0x8000, scoped, tag = 'input window, operand 0']
    #allocation4 [shape = 's32[2]{0}', space=sflag, size = 0x8, scoped, tag = 'scoped memory for tpu_custom_call.1']
    #allocation5 [shape = 's32[2]{0}', space=sflag, size = 0x8, scoped, tag = 'scoped memory for tpu_custom_call.1']
    #allocation6 [shape = 's32[2]{0}', space=sflag, size = 0x8, scoped, tag = 'scoped memory for tpu_custom_call.1']
    #allocation7 [shape = 'u8[512]{0}', space=smem, size = 0x200, scoped, tag = 'input window, operand 3, single buffered']
    #allocation8 [shape = 'u8[32768]{0}', space=vmem, size = 0x8000, scoped, tag = 'input window, operand 4, single buffered']
    #allocation9 [shape = 's32[1]{0}', space=sflag, size = 0x4, scoped, tag = 'scoped memory for tpu_custom_call.1']
    #allocation10 [shape = 'u8[131072]{0}', space=vmem, size = 0x20000, scoped, tag = 'input window, operand 6, single buffered']
    #allocation11 [shape = 'u8[131072]{0}', space=vmem, size = 0x20000, scoped, tag = 'input window, operand 10, single buffered']
    #allocation12 [shape = 's32[1]{0}', space=sflag, size = 0x4, scoped, tag = 'scoped memory for tpu_custom_call.1']
    #allocation13 [shape = 'u8[2048]{0}', space=vmem, size = 0x800, scoped, tag = 'output window, operand 0']
    %17 = vsyncpa [#allocation4], 0
    %s18 = scalar_lea.sflag [#allocation4], 1
    %19 = vsyncpa %s18, 0
    %20 = vsyncpa [#allocation6], 0
    %21 = vsyncpa [#allocation9], 0
    %22 = vsyncpa [#allocation12], 0
    %23 = vsyncpa [#allocation5], 0
    %s24 = scalar_lea.sflag [#allocation5], 1
    %25 = vsyncpa %s24, 0
    loop: start=0, step=1, limit=4
    $region2: #{tpu_custom_call.1} parent=1 // loop_pre_header
      _
    $region3: #{tpu_custom_call.1} parent=1 // loop_header
      %s27 = sphi 0, %s31
      %p28 = scmp.ge.s32.totalorder %s27, 4
      %s34 = sphi 0, %s46
      %s35 = sphi 0, %s42
      %s36 = sphi 0, %s34
      %s37 = sphi 0, %s35
      %s38 = sphi 0, %s36
      %s39 = sphi 0, %s37
      %s51 = sphi 0, %s53
      %s54 = sphi 0, %s51
      %s55 = sphi 0, %s54
      %s71 = sphi 0, %s55
      %s79 = sphi 0, %s81
      %s82 = sphi 0, %s79
      %s83 = sphi 0, %s82
      %s99 = sphi 0, %s83
      %s105 = sphi 0, %s107
      %s108 = sphi 0, %s105
      %s109 = sphi 0, %s108
      %s125 = sphi 0, %s109
      %s129 = sphi 0, %s129
      %s131 = sphi 0, %s129
      %s132 = sphi 0, %s131
      %s146 = sphi 0, %s132
      %s150 = sphi 0, %s150
      %s152 = sphi 0, %s150
      %s153 = sphi 0, %s152
      %s167 = sphi 0, %s153
      %s171 = sphi 0, %s171
      %s173 = sphi 0, %s171
      %s174 = sphi 0, %s173
      %s188 = sphi 0, %s174
      %s192 = sphi 0, %s192
      %s194 = sphi 0, %s192
      %s195 = sphi 0, %s194
      %s209 = sphi 0, %s195
      %s213 = sphi 0, %s213
      %s215 = sphi 0, %s213
      %s216 = sphi 0, %s215
      %s230 = sphi 0, %s216
      %s234 = sphi 0, %s234
      %s236 = sphi 0, %s234
      %s237 = sphi 0, %s236
      %s251 = sphi 0, %s237
      %s255 = sphi 0, %s255
      %s257 = sphi 0, %s255
      %s258 = sphi 0, %s257
      %s272 = sphi 0, %s258
      %s276 = sphi 0, %s276
      %s278 = sphi 0, %s276
      %s279 = sphi 0, %s278
      %s293 = sphi 0, %s279
      %s297 = sphi 0, %s297
      %s299 = sphi 0, %s297
      %s300 = sphi 0, %s299
      %s314 = sphi 0, %s300
      %s320 = sphi 0, %s322
      %s323 = sphi 0, %s320
      %s324 = sphi 0, %s323
      %s340 = sphi 0, %s324
    $region4: #{tpu_custom_call.1} parent=1 // loop_header_branch
      %30 = sbr.rel (%p28) target = $region8
    $region5: #{tpu_custom_call.1} parent=1 // loop_body
      %s32 = ssub.s32 %s27, 1
      %s33 = ssub.s32 %s27, 2
      %s40 = sadd.s32 1, %s35
      %p41 = scmp.ge.s32.totalorder %s40, 1
      %s42 = scalar_select %p41, 0, %s40
      %s43 = sadd.s32 1, %s34
      %s44 = scalar_select %p41, %s43, %s34
      %p45 = scmp.ge.s32.totalorder %s44, 2
      %s46 = scalar_select %p45, 0, %s44
      %s47 = ssub.s32 %s34, %s46
      %s48 = ssub.s32 %s35, %s42
      %s49 = sor.u32 %s47, %s48
      %p50 = scmp.eq.s32.totalorder %s49, 0
      %s52 = sadd.s32 %s51, 1
      %s53 = scalar_select %p50, %s51, %s52
      %p56 = pneg %p50
      %p57 = scmp.eq.s32.totalorder %s27, 1
      %p58 = por %p56, %p57
      %p59 = scmp.ne.s32.totalorder %s51, %s54
      %p60 = scmp.eq.s32.totalorder %s27, 0
      %p61 = por %p59, %p60
      %p62 = scmp.ne.s32.totalorder %s51, %s54
      %p63 = scmp.eq.s32.totalorder %s32, 1
      %p64 = por %p62, %p63
      %p65 = scmp.ne.s32.totalorder %s54, %s55
      %p66 = scmp.eq.s32.totalorder %s32, 0
      %p67 = por %p65, %p66
      %p68 = scmp.ne.s32.totalorder %s54, %s55
      %p69 = scmp.eq.s32.totalorder %s33, 1
      %p70 = por %p68, %p69
      %p72 = scmp.ne.s32.totalorder %s55, %s71
      %p73 = scmp.eq.s32.totalorder %s33, 0
      %p74 = por %p72, %p73
      %s75 = ssub.s32 %s34, %s46
      %s76 = ssub.s32 %s35, %s42
      %s77 = sor.u32 %s75, %s76
      %p78 = scmp.eq.s32.totalorder %s77, 0
      %s80 = sadd.s32 %s79, 1
      %s81 = scalar_select %p78, %s79, %s80
      %p84 = pneg %p78
      %p85 = scmp.eq.s32.totalorder %s27, 1
      %p86 = por %p84, %p85
      %p87 = scmp.ne.s32.totalorder %s79, %s82
      %p88 = scmp.eq.s32.totalorder %s27, 0
      %p89 = por %p87, %p88
      %p90 = scmp.ne.s32.totalorder %s79, %s82
      %p91 = scmp.eq.s32.totalorder %s32, 1
      %p92 = por %p90, %p91
      %p93 = scmp.ne.s32.totalorder %s82, %s83
      %p94 = scmp.eq.s32.totalorder %s32, 0
      %p95 = por %p93, %p94
      %p96 = scmp.ne.s32.totalorder %s82, %s83
      %p97 = scmp.eq.s32.totalorder %s33, 1
      %p98 = por %p96, %p97
      %p100 = scmp.ne.s32.totalorder %s83, %s99
      %p101 = scmp.eq.s32.totalorder %s33, 0
      %p102 = por %p100, %p101
      %s103 = ssub.s32 %s35, %s42
      %p104 = scmp.eq.s32.totalorder %s103, 0
      %s106 = sadd.s32 %s105, 1
      %s107 = scalar_select %p104, %s105, %s106
      %p110 = pneg %p104
      %p111 = scmp.eq.s32.totalorder %s27, 1
      %p112 = por %p110, %p111
      %p113 = scmp.ne.s32.totalorder %s105, %s108
      %p114 = scmp.eq.s32.totalorder %s27, 0
      %p115 = por %p113, %p114
      %p116 = scmp.ne.s32.totalorder %s105, %s108
      %p117 = scmp.eq.s32.totalorder %s32, 1
      %p118 = por %p116, %p117
      %p119 = scmp.ne.s32.totalorder %s108, %s109
      %p120 = scmp.eq.s32.totalorder %s32, 0
      %p121 = por %p119, %p120
      %p122 = scmp.ne.s32.totalorder %s108, %s109
      %p123 = scmp.eq.s32.totalorder %s33, 1
      %p124 = por %p122, %p123
      %p126 = scmp.ne.s32.totalorder %s109, %s125
      %p127 = scmp.eq.s32.totalorder %s33, 0
      %p128 = por %p126, %p127
      %s130 = sadd.s32 %s129, 1
      %p133 = scmp.eq.s32.totalorder %s27, 1
      %p134 = scmp.ne.s32.totalorder %s129, %s131
      %p135 = scmp.eq.s32.totalorder %s27, 0
      %p136 = por %p134, %p135
      %p137 = scmp.ne.s32.totalorder %s129, %s131
      %p138 = scmp.eq.s32.totalorder %s32, 1
      %p139 = por %p137, %p138
      %p140 = scmp.ne.s32.totalorder %s131, %s132
      %p141 = scmp.eq.s32.totalorder %s32, 0
      %p142 = por %p140, %p141
      %p143 = scmp.ne.s32.totalorder %s131, %s132
      %p144 = scmp.eq.s32.totalorder %s33, 1
      %p145 = por %p143, %p144
      %p147 = scmp.ne.s32.totalorder %s132, %s146
      %p148 = scmp.eq.s32.totalorder %s33, 0
      %p149 = por %p147, %p148
      %s151 = sadd.s32 %s150, 1
      %p154 = scmp.eq.s32.totalorder %s27, 1
      %p155 = scmp.ne.s32.totalorder %s150, %s152
      %p156 = scmp.eq.s32.totalorder %s27, 0
      %p157 = por %p155, %p156
      %p158 = scmp.ne.s32.totalorder %s150, %s152
      %p159 = scmp.eq.s32.totalorder %s32, 1
      %p160 = por %p158, %p159
      %p161 = scmp.ne.s32.totalorder %s152, %s153
      %p162 = scmp.eq.s32.totalorder %s32, 0
      %p163 = por %p161, %p162
      %p164 = scmp.ne.s32.totalorder %s152, %s153
      %p165 = scmp.eq.s32.totalorder %s33, 1
      %p166 = por %p164, %p165
      %p168 = scmp.ne.s32.totalorder %s153, %s167
      %p169 = scmp.eq.s32.totalorder %s33, 0
      %p170 = por %p168, %p169
      %s172 = sadd.s32 %s171, 1
      %p175 = scmp.eq.s32.totalorder %s27, 1
      %p176 = scmp.ne.s32.totalorder %s171, %s173
      %p177 = scmp.eq.s32.totalorder %s27, 0
      %p178 = por %p176, %p177
      %p179 = scmp.ne.s32.totalorder %s171, %s173
      %p180 = scmp.eq.s32.totalorder %s32, 1
      %p181 = por %p179, %p180
      %p182 = scmp.ne.s32.totalorder %s173, %s174
      %p183 = scmp.eq.s32.totalorder %s32, 0
      %p184 = por %p182, %p183
      %p185 = scmp.ne.s32.totalorder %s173, %s174
      %p186 = scmp.eq.s32.totalorder %s33, 1
      %p187 = por %p185, %p186
      %p189 = scmp.ne.s32.totalorder %s174, %s188
      %p190 = scmp.eq.s32.totalorder %s33, 0
      %p191 = por %p189, %p190
      %s193 = sadd.s32 %s192, 1
      %p196 = scmp.eq.s32.totalorder %s27, 1
      %p197 = scmp.ne.s32.totalorder %s192, %s194
      %p198 = scmp.eq.s32.totalorder %s27, 0
      %p199 = por %p197, %p198
      %p200 = scmp.ne.s32.totalorder %s192, %s194
      %p201 = scmp.eq.s32.totalorder %s32, 1
      %p202 = por %p200, %p201
      %p203 = scmp.ne.s32.totalorder %s194, %s195
      %p204 = scmp.eq.s32.totalorder %s32, 0
      %p205 = por %p203, %p204
      %p206 = scmp.ne.s32.totalorder %s194, %s195
      %p207 = scmp.eq.s32.totalorder %s33, 1
      %p208 = por %p206, %p207
      %p210 = scmp.ne.s32.totalorder %s195, %s209
      %p211 = scmp.eq.s32.totalorder %s33, 0
      %p212 = por %p210, %p211
      %s214 = sadd.s32 %s213, 1
      %p217 = scmp.eq.s32.totalorder %s27, 1
      %p218 = scmp.ne.s32.totalorder %s213, %s215
      %p219 = scmp.eq.s32.totalorder %s27, 0
      %p220 = por %p218, %p219
      %p221 = scmp.ne.s32.totalorder %s213, %s215
      %p222 = scmp.eq.s32.totalorder %s32, 1
      %p223 = por %p221, %p222
      %p224 = scmp.ne.s32.totalorder %s215, %s216
      %p225 = scmp.eq.s32.totalorder %s32, 0
      %p226 = por %p224, %p225
      %p227 = scmp.ne.s32.totalorder %s215, %s216
      %p228 = scmp.eq.s32.totalorder %s33, 1
      %p229 = por %p227, %p228
      %p231 = scmp.ne.s32.totalorder %s216, %s230
      %p232 = scmp.eq.s32.totalorder %s33, 0
      %p233 = por %p231, %p232
      %s235 = sadd.s32 %s234, 1
      %p238 = scmp.eq.s32.totalorder %s27, 1
      %p239 = scmp.ne.s32.totalorder %s234, %s236
      %p240 = scmp.eq.s32.totalorder %s27, 0
      %p241 = por %p239, %p240
      %p242 = scmp.ne.s32.totalorder %s234, %s236
      %p243 = scmp.eq.s32.totalorder %s32, 1
      %p244 = por %p242, %p243
      %p245 = scmp.ne.s32.totalorder %s236, %s237
      %p246 = scmp.eq.s32.totalorder %s32, 0
      %p247 = por %p245, %p246
      %p248 = scmp.ne.s32.totalorder %s236, %s237
      %p249 = scmp.eq.s32.totalorder %s33, 1
      %p250 = por %p248, %p249
      %p252 = scmp.ne.s32.totalorder %s237, %s251
      %p253 = scmp.eq.s32.totalorder %s33, 0
      %p254 = por %p252, %p253
      %s256 = sadd.s32 %s255, 1
      %p259 = scmp.eq.s32.totalorder %s27, 1
      %p260 = scmp.ne.s32.totalorder %s255, %s257
      %p261 = scmp.eq.s32.totalorder %s27, 0
      %p262 = por %p260, %p261
      %p263 = scmp.ne.s32.totalorder %s255, %s257
      %p264 = scmp.eq.s32.totalorder %s32, 1
      %p265 = por %p263, %p264
      %p266 = scmp.ne.s32.totalorder %s257, %s258
      %p267 = scmp.eq.s32.totalorder %s32, 0
      %p268 = por %p266, %p267
      %p269 = scmp.ne.s32.totalorder %s257, %s258
      %p270 = scmp.eq.s32.totalorder %s33, 1
      %p271 = por %p269, %p270
      %p273 = scmp.ne.s32.totalorder %s258, %s272
      %p274 = scmp.eq.s32.totalorder %s33, 0
      %p275 = por %p273, %p274
      %s277 = sadd.s32 %s276, 1
      %p280 = scmp.eq.s32.totalorder %s27, 1
      %p281 = scmp.ne.s32.totalorder %s276, %s278
      %p282 = scmp.eq.s32.totalorder %s27, 0
      %p283 = por %p281, %p282
      %p284 = scmp.ne.s32.totalorder %s276, %s278
      %p285 = scmp.eq.s32.totalorder %s32, 1
      %p286 = por %p284, %p285
      %p287 = scmp.ne.s32.totalorder %s278, %s279
      %p288 = scmp.eq.s32.totalorder %s32, 0
      %p289 = por %p287, %p288
      %p290 = scmp.ne.s32.totalorder %s278, %s279
      %p291 = scmp.eq.s32.totalorder %s33, 1
      %p292 = por %p290, %p291
      %p294 = scmp.ne.s32.totalorder %s279, %s293
      %p295 = scmp.eq.s32.totalorder %s33, 0
      %p296 = por %p294, %p295
      %s298 = sadd.s32 %s297, 1
      %p301 = scmp.eq.s32.totalorder %s27, 1
      %p302 = scmp.ne.s32.totalorder %s297, %s299
      %p303 = scmp.eq.s32.totalorder %s27, 0
      %p304 = por %p302, %p303
      %p305 = scmp.ne.s32.totalorder %s297, %s299
      %p306 = scmp.eq.s32.totalorder %s32, 1
      %p307 = por %p305, %p306
      %p308 = scmp.ne.s32.totalorder %s299, %s300
      %p309 = scmp.eq.s32.totalorder %s32, 0
      %p310 = por %p308, %p309
      %p311 = scmp.ne.s32.totalorder %s299, %s300
      %p312 = scmp.eq.s32.totalorder %s33, 1
      %p313 = por %p311, %p312
      %p315 = scmp.ne.s32.totalorder %s300, %s314
      %p316 = scmp.eq.s32.totalorder %s33, 0
      %p317 = por %p315, %p316
      %s318 = ssub.s32 %s34, %s46
      %p319 = scmp.eq.s32.totalorder %s318, 0
      %s321 = sadd.s32 %s320, 1
      %s322 = scalar_select %p319, %s320, %s321
      %p325 = pneg %p319
      %p326 = scmp.eq.s32.totalorder %s27, 1
      %p327 = por %p325, %p326
      %p328 = scmp.ne.s32.totalorder %s320, %s323
      %p329 = scmp.eq.s32.totalorder %s27, 0
      %p330 = por %p328, %p329
      %p331 = scmp.ne.s32.totalorder %s320, %s323
      %p332 = scmp.eq.s32.totalorder %s32, 1
      %p333 = por %p331, %p332
      %p334 = scmp.ne.s32.totalorder %s323, %s324
      %p335 = scmp.eq.s32.totalorder %s32, 0
      %p336 = por %p334, %p335
      %p337 = scmp.ne.s32.totalorder %s323, %s324
      %p338 = scmp.eq.s32.totalorder %s33, 1
      %p339 = por %p337, %p338
      %p341 = scmp.ne.s32.totalorder %s324, %s340
      %p342 = scmp.eq.s32.totalorder %s33, 0
      %p343 = por %p341, %p342
      %p344 = scmp.le.s32.totalorder 1, %s27
      %p345 = scmp.lt.s32.totalorder %s27, 3
      %p346 = pnand %p344, %p345
      %p347 = pneg %p346
      // Predicated region
      $region9: #{tpu_custom_call.1} parent=5 // pred_check
        _
      $region10: #{tpu_custom_call.1} parent=5 // pred_check_branch
        %349 = sbr.rel (%p346) target = $region12
      $region11: #{tpu_custom_call.1} parent=5 // pred_region
        %s350 = ssub.s32 %s27, 1
        // Predicated region
        $region13: #{tpu_custom_call.1} parent=11 // pred_check
          %p351 = pneg %p121
        $region14: #{tpu_custom_call.1} parent=11 // pred_check_branch
          %353 = sbr.rel (%p351) target = $region16
        $region15: #{tpu_custom_call.1} parent=11 // pred_region
          %s354 = smul.u32 2, %s37
          %p355 = scmp.lt.s32.totalorder %s354, 1
          %s356 = scalar_select %p355, %s354, 1
          %s357 = smul.addr %s356, 2
          %s358 = smul.addr %s357, 8
          %s359 = scalar_lea.vmem %s2, %s358
          %s360 = smul.u32 2, %s37
        $region16: #{tpu_custom_call.1} parent=11 // pred_fallthru
          _
        // Predicated region
        $region17: #{tpu_custom_call.1} parent=11 // pred_check
          %p361 = pneg %p142
        $region18: #{tpu_custom_call.1} parent=11 // pred_check_branch
          %363 = sbr.rel (%p361) target = $region20
        $region19: #{tpu_custom_call.1} parent=11 // pred_region
          %365 = vsyncadd [#allocation6], 0
          %s367 = sshll.u32 %s3, 4
          %s368 = int_to_ptr.hbm [resolvable:$true] %s367
          %370 = dma.hbm_to_smem %s368, 16, [#allocation7], [#allocation6]
        $region20: #{tpu_custom_call.1} parent=11 // pred_fallthru
          _
        // Predicated region
        $region21: #{tpu_custom_call.1} parent=11 // pred_check
          %p371 = pneg %p163
        $region22: #{tpu_custom_call.1} parent=11 // pred_check_branch
          %373 = sbr.rel (%p371) target = $region24
        $region23: #{tpu_custom_call.1} parent=11 // pred_region
          %375 = vsyncadd [#allocation9], 0
          %s376 = sshll.u32 %s4, 4
          %s377 = int_to_ptr.hbm [resolvable:$true] %s376
          %s378 = sshll.u32 [#allocation8], 4
          %s379 = int_to_ptr.vmem [resolvable:$true] %s378
          %384 = dma.hbm_to_vmem [thread:$0]  %s377, 1024, %s379, [#allocation9], 128, 128, 8
        $region24: #{tpu_custom_call.1} parent=11 // pred_fallthru
          _
        // Predicated region
        $region25: #{tpu_custom_call.1} parent=11 // pred_check
          %p385 = pneg %p184
        $region26: #{tpu_custom_call.1} parent=11 // pred_check_branch
          %387 = sbr.rel (%p385) target = $region28
        $region27: #{tpu_custom_call.1} parent=11 // pred_region
          _
        $region28: #{tpu_custom_call.1} parent=11 // pred_fallthru
          _
        // Predicated region
        $region29: #{tpu_custom_call.1} parent=11 // pred_check
          %p388 = pneg %p205
        $region30: #{tpu_custom_call.1} parent=11 // pred_check_branch
          %390 = sbr.rel (%p388) target = $region32
        $region31: #{tpu_custom_call.1} parent=11 // pred_region
          %392 = vsyncadd [#allocation9], 0
          %s393 = sshll.u32 %s6, 4
          %s394 = int_to_ptr.hbm [resolvable:$true] %s393
          %s395 = sshll.u32 [#allocation10], 4
          %s396 = int_to_ptr.vmem [resolvable:$true] %s395
          %401 = dma.hbm_to_vmem [thread:$0]  %s394, 4096, %s396, [#allocation9], 128, 128, 8
        $region32: #{tpu_custom_call.1} parent=11 // pred_fallthru
          _
        // Predicated region
        $region33: #{tpu_custom_call.1} parent=11 // pred_check
          %p402 = pneg %p226
        $region34: #{tpu_custom_call.1} parent=11 // pred_check_branch
          %404 = sbr.rel (%p402) target = $region36
        $region35: #{tpu_custom_call.1} parent=11 // pred_region
          _
        $region36: #{tpu_custom_call.1} parent=11 // pred_fallthru
          _
        // Predicated region
        $region37: #{tpu_custom_call.1} parent=11 // pred_check
          %p405 = pneg %p247
        $region38: #{tpu_custom_call.1} parent=11 // pred_check_branch
          %407 = sbr.rel (%p405) target = $region40
        $region39: #{tpu_custom_call.1} parent=11 // pred_region
          _
        $region40: #{tpu_custom_call.1} parent=11 // pred_fallthru
          _
        // Predicated region
        $region41: #{tpu_custom_call.1} parent=11 // pred_check
          %p408 = pneg %p268
        $region42: #{tpu_custom_call.1} parent=11 // pred_check_branch
          %410 = sbr.rel (%p408) target = $region44
        $region43: #{tpu_custom_call.1} parent=11 // pred_region
          _
        $region44: #{tpu_custom_call.1} parent=11 // pred_fallthru
          _
        // Predicated region
        $region45: #{tpu_custom_call.1} parent=11 // pred_check
          %p411 = pneg %p289
        $region46: #{tpu_custom_call.1} parent=11 // pred_check_branch
          %413 = sbr.rel (%p411) target = $region48
        $region47: #{tpu_custom_call.1} parent=11 // pred_region
          %415 = vsyncadd [#allocation12], 0
          %s416 = sshll.u32 %s10, 4
          %s417 = int_to_ptr.hbm [resolvable:$true] %s416
          %s418 = sshll.u32 [#allocation11], 4
          %s419 = int_to_ptr.vmem [resolvable:$true] %s418
          %424 = dma.hbm_to_vmem [thread:$0]  %s417, 4096, %s419, [#allocation12], 128, 128, 8
        $region48: #{tpu_custom_call.1} parent=11 // pred_fallthru
          _
        // Predicated region
        $region49: #{tpu_custom_call.1} parent=11 // pred_check
          %p425 = pneg %p310
        $region50: #{tpu_custom_call.1} parent=11 // pred_check_branch
          %427 = sbr.rel (%p425) target = $region52
        $region51: #{tpu_custom_call.1} parent=11 // pred_region
          _
        $region52: #{tpu_custom_call.1} parent=11 // pred_fallthru
          _
      $region12: #{tpu_custom_call.1} parent=5 // pred_fallthru
        _
      %p428 = scmp.lt.s32.totalorder %s27, 2
      // Predicated region
      $region53: #{tpu_custom_call.1} parent=5 // pred_check
        %p429 = pneg %p428
      $region54: #{tpu_custom_call.1} parent=5 // pred_check_branch
        %431 = sbr.rel (%p429) target = $region56
      $region55: #{tpu_custom_call.1} parent=5 // pred_region
        // Predicated region
        $region57: #{tpu_custom_call.1} parent=55 // pred_check
          %p432 = pneg %p61
        $region58: #{tpu_custom_call.1} parent=55 // pred_check_branch
          %434 = sbr.rel (%p432) target = $region60
        $region59: #{tpu_custom_call.1} parent=55 // pred_region
          %s435 = sand.u32 %s51, 1
          %s436 = scalar_lea.sflag [#allocation4], %s435
          %s437 = sand.u32 %s51, 1
          %s438 = smul.addr %s437, 32
          %s439 = scalar_lea.vmem [#allocation3], %s438
          %s440 = smul.u32 2, %s35
          %442 = vsyncadd %s436, 0
          %s443 = smul.addr %s440, 2
          %s444 = smul.addr %s34, 4
          %s445 = sadd.s32 %s443, %s444
          %s446 = smul.addr %s445, 8
          %s447 = scalar_lea.hbm %s0, %s446
          %s448 = sshll.u32 %s447, 4
          %s449 = int_to_ptr.hbm [resolvable:$true] %s448
          %s450 = sshll.u32 %s439, 4
          %s451 = int_to_ptr.vmem [resolvable:$true] %s450
          %456 = dma.hbm_to_vmem [thread:$0]  %s449, 512, %s451, %s436, 128, 128, 8
        $region60: #{tpu_custom_call.1} parent=55 // pred_fallthru
          _
        // Predicated region
        $region61: #{tpu_custom_call.1} parent=55 // pred_check
          %p457 = pneg %p89
        $region62: #{tpu_custom_call.1} parent=55 // pred_check_branch
          %459 = sbr.rel (%p457) target = $region64
        $region63: #{tpu_custom_call.1} parent=55 // pred_region
          %s460 = smul.u32 2, %s35
          %p461 = scmp.lt.s32.totalorder %s34, 1
          %s462 = scalar_select %p461, %s34, 1
          %p463 = scmp.lt.s32.totalorder %s460, 1
          %s464 = scalar_select %p463, %s460, 1
          %s465 = smul.addr %s464, 2
          %s466 = smul.addr %s462, 4
          %s467 = sadd.s32 %s465, %s466
          %s468 = smul.addr %s467, 4
          %s469 = scalar_lea.vmem %s1, %s468
          %s470 = smul.u32 2, %s35
        $region64: #{tpu_custom_call.1} parent=55 // pred_fallthru
          _
      $region56: #{tpu_custom_call.1} parent=5 // pred_fallthru
        _
      %p471 = scmp.le.s32.totalorder 1, %s27
      %p472 = scmp.lt.s32.totalorder %s27, 3
      %p473 = pnand %p471, %p472
      %p474 = pneg %p473
      // Predicated region
      $region65: #{tpu_custom_call.1} parent=5 // pred_check
        _
      $region66: #{tpu_custom_call.1} parent=5 // pred_check_branch
        %476 = sbr.rel (%p473) target = $region68
      $region67: #{tpu_custom_call.1} parent=5 // pred_region
        %s477 = ssub.s32 %s27, 1
        %s478 = sand.u32 %s54, 1
        %s479 = scalar_lea.sflag [#allocation4], %s478
        %s480 = sand.u32 %s54, 1
        %s481 = smul.addr %s480, 32
        %s482 = scalar_lea.vmem [#allocation3], %s481
        // Predicated region
        $region69: #{tpu_custom_call.1} parent=67 // pred_check
          %p483 = pneg %p67
        $region70: #{tpu_custom_call.1} parent=67 // pred_check_branch
          %485 = sbr.rel (%p483) target = $region72
        $region71: #{tpu_custom_call.1} parent=67 // pred_region
          %487 = dma.done %s479, 512
        $region72: #{tpu_custom_call.1} parent=67 // pred_fallthru
          _
        // Predicated region
        $region73: #{tpu_custom_call.1} parent=67 // pred_check
          %p488 = pneg %p142
        $region74: #{tpu_custom_call.1} parent=67 // pred_check_branch
          %490 = sbr.rel (%p488) target = $region76
        $region75: #{tpu_custom_call.1} parent=67 // pred_region
          %492 = dma.done [#allocation6], 16
        $region76: #{tpu_custom_call.1} parent=67 // pred_fallthru
          _
        // Predicated region
        $region77: #{tpu_custom_call.1} parent=67 // pred_check
          %p493 = pneg %p163
        $region78: #{tpu_custom_call.1} parent=67 // pred_check_branch
          %495 = sbr.rel (%p493) target = $region80
        $region79: #{tpu_custom_call.1} parent=67 // pred_region
          %497 = dma.done [#allocation9], 1024
        $region80: #{tpu_custom_call.1} parent=67 // pred_fallthru
          _
        // Predicated region
        $region81: #{tpu_custom_call.1} parent=67 // pred_check
          %p498 = pneg %p205
        $region82: #{tpu_custom_call.1} parent=67 // pred_check_branch
          %500 = sbr.rel (%p498) target = $region84
        $region83: #{tpu_custom_call.1} parent=67 // pred_region
          %502 = dma.done [#allocation9], 4096
        $region84: #{tpu_custom_call.1} parent=67 // pred_fallthru
          _
        // Predicated region
        $region85: #{tpu_custom_call.1} parent=67 // pred_check
          %p503 = pneg %p289
        $region86: #{tpu_custom_call.1} parent=67 // pred_check_branch
          %505 = sbr.rel (%p503) target = $region88
        $region87: #{tpu_custom_call.1} parent=67 // pred_region
          %507 = dma.done [#allocation12], 4096
        $region88: #{tpu_custom_call.1} parent=67 // pred_fallthru
          _
        %508 = sfence
        %s509 = sand.u32 %s54, 1
        %s510 = scalar_lea.sflag [#allocation4], %s509
        %s511 = sand.u32 %s54, 1
        %s512 = smul.addr %s511, 32
        %s513 = scalar_lea.vmem [#allocation3], %s512
        %p514 = pneg %p67
        %p515 = pneg %p64
        %s516 = smul.u32 2, %s37
        %p517 = scmp.lt.s32.totalorder %s36, 1
        %s518 = scalar_select %p517, %s36, 1
        %p519 = scmp.lt.s32.totalorder %s516, 1
        %s520 = scalar_select %p519, %s516, 1
        %s521 = smul.addr %s520, 2
        %s522 = smul.addr %s518, 4
        %s523 = sadd.s32 %s521, %s522
        %s524 = smul.addr %s523, 4
        %s525 = scalar_lea.vmem %s1, %s524
        %p526 = pneg %p95
        %p527 = pneg %p92
        %s528 = smul.u32 2, %s37
        %p529 = scmp.lt.s32.totalorder %s528, 1
        %s530 = scalar_select %p529, %s528, 1
        %s531 = smul.addr %s530, 2
        %s532 = smul.addr %s531, 8
        %s533 = scalar_lea.vmem %s2, %s532
        %p534 = pneg %p121
        %p535 = pneg %p118
        %p536 = pneg %p142
        %p537 = pneg %p139
        %p538 = pneg %p163
        %p539 = pneg %p160
        %p540 = pneg %p184
        %p541 = pneg %p181
        %p542 = pneg %p205
        %p543 = pneg %p202
        %p544 = pneg %p226
        %p545 = pneg %p223
        %p546 = pneg %p247
        %p547 = pneg %p244
        %p548 = pneg %p268
        %p549 = pneg %p265
        %p550 = pneg %p289
        %p551 = pneg %p286
        %p552 = pneg %p310
        %p553 = pneg %p307
        %p554 = pneg %p336
        %p555 = pneg %p333
        %s556 = sand.u32 %s323, 1
        %s557 = scalar_lea.sflag [#allocation5], %s556
        %s558 = sand.u32 %s323, 1
        %s559 = smul.addr %s558, 2
        %s560 = scalar_lea.vmem [#allocation13], %s559
        %s561 = smul.u32 2, %s37
        %s562 = smul.u32 2, %s37
        %p563 = scmp.lt.s32.totalorder %s36, 1
        %s564 = scalar_select %p563, %s36, 1
        %p565 = scmp.lt.s32.totalorder %s562, 1
        %s566 = scalar_select %p565, %s562, 1
        %s567 = smul.addr %s566, 2
        %s568 = smul.addr %s564, 4
        %s569 = sadd.s32 %s567, %s568
        %s570 = smul.addr %s569, 4
        %s571 = scalar_lea.vmem %s1, %s570
        %s572 = smul.u32 2, %s37
        %s573 = smul.u32 2, %s37
        %p574 = scmp.lt.s32.totalorder %s573, 1
        %s575 = scalar_select %p574, %s573, 1
        %s576 = smul.addr %s575, 2
        %s577 = smul.addr %s576, 8
        %s578 = scalar_lea.vmem %s2, %s577
        %s579 = smul.u32 2, %s37
        %v580 = vld [vmem:[%s482] sm:$0xff]
        %v581 = vld [vmem:[%s482 + $0x8] sm:$0xff]
        %v582 = vld [vmem:[%s482 + $0x10] sm:$0xff]
        %v583 = vld [vmem:[%s482 + $0x18] sm:$0xff]
        %s584 = smul.u32 %s36, 32
        %s585 = scalar_lea.vmem [#allocation8], %s584
        %v586 = vld [vmem:[%s585] sm:$0xff]
        %v587 = vld [vmem:[%s585 + $0x8] sm:$0xff]
        %v588 = vld [vmem:[%s585 + $0x10] sm:$0xff]
        %v589 = vld [vmem:[%s585 + $0x18] sm:$0xff]
        %s590 = scalar_lea.vmem %s5, %s36
        %v591 = vld [vmem:[%s590] sm:$0x1]
        %v593 = vperm.slane %v591, 0
        %vm595 = vcmask 261120
        %v597 = vsel %vm595, %v580, 0
        %v600 = vsel %vm595, %v581, 0
        %v603 = vsel %vm595, %v582, 0
        %v606 = vsel %vm595, %v583, 0
        %608 = vmatpush.msra.mxu0 0.0
        %609 = vmatpush.msra.mxu0 0.0
        %610 = vmatpush.msra.mxu0 0.0
        %611 = vmatpush.msra.mxu0 0.0
        %612 = vmatpush.msra.mxu0 0.0
        %613 = vmatpush.msra.mxu0 0.0
        %614 = vmatpush.msra.mxu0 0.0
        %615 = vmatpush.msra.mxu0 0.0
        %616 = vmatpush.msra.mxu0 0.0
        %617 = vmatpush.msra.mxu0 0.0
        %618 = vmatpush.msra.mxu0 0.0
        %619 = vmatpush.msra.mxu0 0.0
        %620 = vmatpush.msra.mxu0 %v589
        %621 = vmatpush.msra.mxu0 %v588
        %622 = vmatpush.msra.mxu0 %v587
        %623 = vmatpush.msra.mxu0 %v586
        %624 = vmatmul.f32.gmra.mxu0 %v597
        %v625 = vpop.f32.mrf.mxu0
        %v626 = vadd.f32 %v593, %v625
        %627 = vmatmul.f32.gmra.mxu0 %v600
        %v628 = vpop.f32.mrf.mxu0
        %v629 = vadd.f32 %v593, %v628
        %630 = vmatmul.f32.gmra.mxu0 %v603
        %v631 = vpop.f32.mrf.mxu0
        %v632 = vadd.f32 %v593, %v631
        %633 = vmatmul.f32.gmra.mxu0 %v606
        %v634 = vpop.f32.mrf.mxu0
        %v635 = vadd.f32 %v593, %v634
        %636 = vdwg.mxu0
        %v637 = vld [vmem:[%s571] sm:$0xf]
        %v638 = vld [vmem:[%s571 + $0x4] sm:$0xf]
        %v639 = vld [vmem:[%s571 + $0x8] sm:$0xf]
        %v640 = vld [vmem:[%s571 + $0xc] sm:$0xf]
        %v641 = vunpack.c.l.bf16 %v637
        %v642 = vunpack.c.l.bf16 %v638
        %v643 = vunpack.c.l.bf16 %v639
        %v644 = vunpack.c.l.bf16 %v640
        %vm645 = vcmask 130048
        %v647 = vsel %vm645, %v641, 0
        %v650 = vsel %vm645, %v642, 0
        %652 = vmatpush.msra.mxu0 0.0
        %653 = vmatpush.msra.mxu0 0.0
        %654 = vmatpush.msra.mxu0 0.0
        %655 = vmatpush.msra.mxu0 0.0
        %656 = vmatpush.msra.mxu0 0.0
        %657 = vmatpush.msra.mxu0 0.0
        %658 = vmatpush.msra.mxu0 0.0
        %659 = vmatpush.msra.mxu0 0.0
        %660 = vmatpush.msra.mxu0 0.0
        %661 = vmatpush.msra.mxu0 0.0
        %662 = vmatpush.msra.mxu0 0.0
        %663 = vmatpush.msra.mxu0 0.0
        %664 = vmatpush.msra.mxu0 0.0
        %665 = vmatpush.msra.mxu0 0.0
        %666 = vmatpush.msra.mxu0 %v629
        %667 = vmatpush.msra.mxu0 %v626
        %668 = vmatmul.f32.gmra.mxu0 %v647
        %v669 = vpop.f32.mrf.mxu0
        %v670 = vadd.f32 0.0, %v669
        %671 = vmatmul.f32.gmra.mxu0 %v650
        %v672 = vpop.f32.mrf.mxu0
        %v673 = vadd.f32 0.0, %v672
        %674 = vdwg.mxu0
        %v676 = vsel %vm645, %v643, 0
        %v679 = vsel %vm645, %v644, 0
        %681 = vmatpush.msra.mxu0 0.0
        %682 = vmatpush.msra.mxu0 0.0
        %683 = vmatpush.msra.mxu0 0.0
        %684 = vmatpush.msra.mxu0 0.0
        %685 = vmatpush.msra.mxu0 0.0
        %686 = vmatpush.msra.mxu0 0.0
        %687 = vmatpush.msra.mxu0 0.0
        %688 = vmatpush.msra.mxu0 0.0
        %689 = vmatpush.msra.mxu0 0.0
        %690 = vmatpush.msra.mxu0 0.0
        %691 = vmatpush.msra.mxu0 0.0
        %692 = vmatpush.msra.mxu0 0.0
        %693 = vmatpush.msra.mxu0 0.0
        %694 = vmatpush.msra.mxu0 0.0
        %695 = vmatpush.msra.mxu0 %v635
        %696 = vmatpush.msra.mxu0 %v632
        %697 = vmatmul.f32.gmra.mxu0 %v676
        %v698 = vpop.f32.mrf.mxu0
        %v699 = vadd.f32 0.0, %v698
        %700 = vmatmul.f32.gmra.mxu0 %v679
        %v701 = vpop.f32.mrf.mxu0
        %v702 = vadd.f32 0.0, %v701
        %703 = vdwg.mxu0
        %s704 = sld [smem:[#allocation7 + %s36]]
        %v705 = vstv %s704
        %v706 = vmul.f32 %v705, %v626
        %v707 = vmul.f32 %v705, %v629
        %v708 = vmul.f32 %v705, %v632
        %v709 = vmul.f32 %v705, %v635
        %s710 = ssub.f32 1.0, %s704
        %v711 = vstv %s710
        %v712 = vmul.f32 %v711, %v670
        %v713 = vmul.f32 %v711, %v673
        %v714 = vmul.f32 %v711, %v699
        %v715 = vmul.f32 %v711, %v702
        %v716 = vadd.f32 %v706, %v712
        %v717 = vadd.f32 %v707, %v713
        %v718 = vadd.f32 %v708, %v714
        %v719 = vadd.f32 %v709, %v715
        %v720 = vld [vmem:[%s578] sm:$0xff]
        %v721 = vld [vmem:[%s578 + $0x8] sm:$0xff]
        %v722 = vld [vmem:[%s578 + $0x10] sm:$0xff]
        %v723 = vld [vmem:[%s578 + $0x18] sm:$0xff]
        %725 = vset.pattern.permute.xlu0 0
        %726 = vperm.xlu0 %725, %v720
        %v727 = vpop.permute.xlu0 %726
        %730 = vset.pattern.permute.xlu0 0
        %731 = vperm.xlu0 %730, %v721
        %v732 = vpop.permute.xlu0 %731
        %735 = vset.pattern.permute.xlu0 0
        %736 = vperm.xlu0 %735, %v722
        %v737 = vpop.permute.xlu0 %736
        %740 = vset.pattern.permute.xlu0 0
        %741 = vperm.xlu0 %740, %v723
        %v742 = vpop.permute.xlu0 %741
        %v744 = vmul.f32 %v716, %v727
        %v745 = vmul.f32 %v717, %v732
        %v746 = vmul.f32 %v718, %v737
        %v747 = vmul.f32 %v719, %v742
        %v748 = vadd.f32 %v744, %v745
        %v749 = vrot.slane %v748, 4
        %v750 = vadd.f32 %v748, %v749
        %v751 = vrot.slane %v750, 2
        %v752 = vadd.f32 %v750, %v751
        %v753 = vrot.slane %v752, 1
        %v754 = vadd.f32 %v752, %v753
        %v755 = vadd.f32 %v746, %v747
        %v756 = vrot.slane %v755, 4
        %v757 = vadd.f32 %v755, %v756
        %v758 = vrot.slane %v757, 2
        %v759 = vadd.f32 %v757, %v758
        %v760 = vrot.slane %v759, 1
        %v761 = vadd.f32 %v759, %v760
        %vm764 = vcmask 1041409
        %v765 = vsel %vm764, %v761, %v754
        %s767 = smul.u32 %s37, 2
        %s768 = scalar_lea.vmem [#allocation2], %s767
        %769 = vst [vmem:[%s768] sm:$0x3] %v765
        %p770 = scmp.eq.s32.totalorder %s37, 0
        // Predicated region
        $region89: #{tpu_custom_call.1} parent=67 // pred_check
          %p771 = pneg %p770
        $region90: #{tpu_custom_call.1} parent=67 // pred_check_branch
          %773 = sbr.rel (%p771) target = $region92
        $region91: #{tpu_custom_call.1} parent=67 // pred_region
          %v774 = vld [vmem:[#allocation2] sm:$0x3]
          %v775 = vtanh.pop %v774
          %s776 = smul.u32 %s36, 128
          %s777 = scalar_lea.vmem [#allocation10], %s776
          %v778 = vld [vmem:[%s777] sm:$0xff]
          %v779 = vld [vmem:[%s777 + $0x8] sm:$0xff]
          %v780 = vld [vmem:[%s777 + $0x10] sm:$0xff]
          %v781 = vld [vmem:[%s777 + $0x18] sm:$0xff]
          %v782 = vld [vmem:[%s777 + $0x20] sm:$0xff]
          %v783 = vld [vmem:[%s777 + $0x28] sm:$0xff]
          %v784 = vld [vmem:[%s777 + $0x30] sm:$0xff]
          %v785 = vld [vmem:[%s777 + $0x38] sm:$0xff]
          %v786 = vld [vmem:[%s777 + $0x40] sm:$0xff]
          %v787 = vld [vmem:[%s777 + $0x48] sm:$0xff]
          %v788 = vld [vmem:[%s777 + $0x50] sm:$0xff]
          %v789 = vld [vmem:[%s777 + $0x58] sm:$0xff]
          %v790 = vld [vmem:[%s777 + $0x60] sm:$0xff]
          %v791 = vld [vmem:[%s777 + $0x68] sm:$0xff]
          %v792 = vld [vmem:[%s777 + $0x70] sm:$0xff]
          %v793 = vld [vmem:[%s777 + $0x78] sm:$0xff]
          %s794 = scalar_lea.vmem %s7, %s36
          %v795 = vld [vmem:[%s794] sm:$0x1]
          %v797 = vperm.slane %v795, 0
          %799 = vmatpush.msra.mxu0 %v793
          %800 = vmatpush.msra.mxu0 %v792
          %801 = vmatpush.msra.mxu0 %v791
          %802 = vmatpush.msra.mxu0 %v790
          %803 = vmatpush.msra.mxu0 %v789
          %804 = vmatpush.msra.mxu0 %v788
          %805 = vmatpush.msra.mxu0 %v787
          %806 = vmatpush.msra.mxu0 %v786
          %807 = vmatpush.msra.mxu0 %v785
          %808 = vmatpush.msra.mxu0 %v784
          %809 = vmatpush.msra.mxu0 %v783
          %810 = vmatpush.msra.mxu0 %v782
          %811 = vmatpush.msra.mxu0 %v781
          %812 = vmatpush.msra.mxu0 %v780
          %813 = vmatpush.msra.mxu0 %v779
          %814 = vmatpush.msra.mxu0 %v778
          %815 = vmatmul.f32.gmra.mxu0 %v775
          %v816 = vpop.f32.mrf.mxu0
          %v817 = vadd.f32 %v797, %v816
          %818 = vdwg.mxu0
          %v819 = vlaneseq
          %v820 = vand.u32 %v819, 127
          %vm821 = vcmp.lt.s32.totalorder %v820, 16
          %v822 = vsel %vm821, 1, 0
          %v823 = vcvt.s32.f32 %v822
          %v824 = vmul.f32 %v817, %v823
          %vm825 = vcmask 1041408
          %v826 = vsel %vm825, %v824, 0.0
          %827 = vadd.xlane.f32.xlu0 %v826
          %v828 = vpop.xlane.xlu0 %827
          %v829 = vmul.f32 %v828, 0.0625
          %v830 = vsub.f32 %v817, %v829
          %v831 = vmul.f32 %v830, %v823
          %v832 = vmul.f32 %v831, %v831
          %v833 = vsel %vm825, %v832, 0.0
          %834 = vadd.xlane.f32.xlu0 %v833
          %v835 = vpop.xlane.xlu0 %834
          %v836 = vmul.f32 %v835, 0.0625
          %v837 = vadd.f32 %v836, 1e-05
          %v838 = vrsqrt.pop %v837
          %v839 = vmul.f32 %v838, %v837
          %v840 = vmul.f32 %v839, %v838
          %v841 = vmul.f32 0.5, %v840
          %v842 = vsub.f32 1.5, %v841
          %v843 = vmul.f32 %v838, %v842
          %vm844 = vweird.f32 %v837
          %vm845 = vweird.f32 %v838
          %vm846 = vmor %vm844, %vm845
          %v847 = vsel %vm846, %v838, %v843
          %v848 = vmul.f32 %v831, %v847
          %s849 = scalar_lea.vmem %s8, %s36
          %v850 = vld [vmem:[%s849] sm:$0x1]
          %v852 = vperm.slane %v850, 0
          %v854 = vmul.f32 %v848, %v852
          %s855 = scalar_lea.vmem %s9, %s36
          %v856 = vld [vmem:[%s855] sm:$0x1]
          %v858 = vperm.slane %v856, 0
          %v860 = vadd.f32 %v854, %v858
          %s861 = scalar_lea.vmem [#allocation11], %s776
          %v862 = vld [vmem:[%s861] sm:$0xff]
          %v863 = vld [vmem:[%s861 + $0x8] sm:$0xff]
          %v864 = vld [vmem:[%s861 + $0x10] sm:$0xff]
          %v865 = vld [vmem:[%s861 + $0x18] sm:$0xff]
          %v866 = vld [vmem:[%s861 + $0x20] sm:$0xff]
          %v867 = vld [vmem:[%s861 + $0x28] sm:$0xff]
          %v868 = vld [vmem:[%s861 + $0x30] sm:$0xff]
          %v869 = vld [vmem:[%s861 + $0x38] sm:$0xff]
          %v870 = vld [vmem:[%s861 + $0x40] sm:$0xff]
          %v871 = vld [vmem:[%s861 + $0x48] sm:$0xff]
          %v872 = vld [vmem:[%s861 + $0x50] sm:$0xff]
          %v873 = vld [vmem:[%s861 + $0x58] sm:$0xff]
          %v874 = vld [vmem:[%s861 + $0x60] sm:$0xff]
          %v875 = vld [vmem:[%s861 + $0x68] sm:$0xff]
          %v876 = vld [vmem:[%s861 + $0x70] sm:$0xff]
          %v877 = vld [vmem:[%s861 + $0x78] sm:$0xff]
          %s878 = scalar_lea.vmem %s11, %s36
          %v879 = vld [vmem:[%s878] sm:$0x1]
          %v881 = vperm.slane %v879, 0
          %883 = vmatpush.msra.mxu0 %v877
          %884 = vmatpush.msra.mxu0 %v876
          %885 = vmatpush.msra.mxu0 %v875
          %886 = vmatpush.msra.mxu0 %v874
          %887 = vmatpush.msra.mxu0 %v873
          %888 = vmatpush.msra.mxu0 %v872
          %889 = vmatpush.msra.mxu0 %v871
          %890 = vmatpush.msra.mxu0 %v870
          %891 = vmatpush.msra.mxu0 %v869
          %892 = vmatpush.msra.mxu0 %v868
          %893 = vmatpush.msra.mxu0 %v867
          %894 = vmatpush.msra.mxu0 %v866
          %895 = vmatpush.msra.mxu0 %v865
          %896 = vmatpush.msra.mxu0 %v864
          %897 = vmatpush.msra.mxu0 %v863
          %898 = vmatpush.msra.mxu0 %v862
          %899 = vmatmul.f32.gmra.mxu0 %v860
          %v900 = vpop.f32.mrf.mxu0
          %v901 = vadd.f32 %v881, %v900
          %902 = vdwg.mxu0
          %v903 = vtanh.pop %v901
          %904 = vst [vmem:[%s560] sm:$0x3] %v903
        $region92: #{tpu_custom_call.1} parent=67 // pred_fallthru
          _
        %s905 = sand.u32 %s323, 1
        %s906 = scalar_lea.sflag [#allocation5], %s905
        %s907 = sand.u32 %s323, 1
        %s908 = smul.addr %s907, 2
        %s909 = scalar_lea.vmem [#allocation13], %s908
        // Predicated region
        $region93: #{tpu_custom_call.1} parent=67 // pred_check
          %p910 = pneg %p333
        $region94: #{tpu_custom_call.1} parent=67 // pred_check_branch
          %912 = sbr.rel (%p910) target = $region96
        $region95: #{tpu_custom_call.1} parent=67 // pred_region
          %914 = vsyncadd %s906, 0
          %s915 = smul.addr %s36, 2
          %s916 = scalar_lea.hbm %s12, %s915
          %s918 = sshll.u32 %s909, 4
          %s919 = int_to_ptr.vmem [resolvable:$true] %s918
          %s920 = sshll.u32 %s916, 4
          %s921 = int_to_ptr.hbm [resolvable:$true] %s920
          %923 = dma.vmem_to_hbm [thread:$0]  %s919, 32, %s921, %s906
        $region96: #{tpu_custom_call.1} parent=67 // pred_fallthru
          _
      $region68: #{tpu_custom_call.1} parent=5 // pred_fallthru
        _
      %p924 = scmp.le.s32.totalorder 2, %s27
      // Predicated region
      $region97: #{tpu_custom_call.1} parent=5 // pred_check
        %p925 = pneg %p924
      $region98: #{tpu_custom_call.1} parent=5 // pred_check_branch
        %927 = sbr.rel (%p925) target = $region100
      $region99: #{tpu_custom_call.1} parent=5 // pred_region
        %s928 = ssub.s32 %s27, 2
        // Predicated region
        $region101: #{tpu_custom_call.1} parent=99 // pred_check
          %p929 = pneg %p339
        $region102: #{tpu_custom_call.1} parent=99 // pred_check_branch
          %931 = sbr.rel (%p929) target = $region104
        $region103: #{tpu_custom_call.1} parent=99 // pred_region
          %s932 = sand.u32 %s324, 1
          %s933 = scalar_lea.sflag [#allocation5], %s932
          %s934 = sand.u32 %s324, 1
          %s935 = smul.addr %s934, 2
          %s936 = scalar_lea.vmem [#allocation13], %s935
          %938 = dma.done %s933, 32
        $region104: #{tpu_custom_call.1} parent=99 // pred_fallthru
          _
      $region100: #{tpu_custom_call.1} parent=5 // pred_fallthru
        _
    $region6: #{tpu_custom_call.1} parent=1 // loop_footer
      %s31 = sadd.s32 1, %s27
    $region7: #{tpu_custom_call.1} parent=1 // loop_footer_branch
      %26 = sbr.rel target = $region3
    $region8: #{tpu_custom_call.1} parent=1 // loop_exit
      _
    %939 = vsyncpa [#allocation4], 1
    %s940 = scalar_lea.sflag [#allocation4], 1
    %941 = vsyncpa %s940, 1
    %942 = vsyncpa [#allocation9], 1
    %943 = vsyncpa [#allocation12], 1
    %944 = vsyncpa [#allocation5], 1
    %s945 = scalar_lea.sflag [#allocation5], 1
    %946 = vsyncpa %s945, 1
    %947 = vsyncpa [#allocation6], 1
    %s948 = scalar_lea.sflag [#allocation6], 1
    %949 = vsyncpa %s948, 1

</llo_original>
